<compile_context>
chip_gen: v5e
topology: v5e:2x2
jax: 0.10.0
libtpu: 0.0.40
codegen_flags: <defaults>
</compile_context>

<pallas_src>
import math

import jax
import jax.numpy as jnp
from jax.experimental import pallas as pl
from jax.experimental.pallas import tpu as pltpu


def _round_up(x, m):
    return ((x + m - 1) // m) * m


def _pe_kernel(params_ref, o_ref):
    """One (tile_r, lanes) block of the sinusoidal PE table.

    params_ref is (2, lanes) f32:
      row 0: scaled_freq[l] = ppr * inv_freq[l]
      row 1: host_bias[l]   = pos_offset[l] * inv_freq[l] + phase[l]
    Element (r, l) = sin(global_row * scaled_freq[l] + host_bias[l]),
    i.e. sin(pos * inv_freq + phase) with pos = global_row * ppr + pos_offset[l]
    and cos obtained via the pi/2 phase offset.
    """
    tile_r, lanes = o_ref.shape
    scaled_freq = params_ref[0:1, :]                          # (1, lanes)
    row0_f = (pl.program_id(0) * tile_r).astype(jnp.float32)  # scalar
    bias = row0_f * scaled_freq + params_ref[1:2, :]          # (1, lanes), once/block
    # int32 iota + convert: Mosaic's native iota is integer; the single convert
    # per element is small next to the sin polynomial.
    local = jax.lax.broadcasted_iota(jnp.int32, (tile_r, lanes), 0).astype(jnp.float32)
    o_ref[...] = jnp.sin(local * scaled_freq + bias).astype(o_ref.dtype)


def _pick_tile_rows(n_rows, lanes):
    """Row tile: multiple of 8 (or full extent), <=4 MiB per block (v5e VMEM),
    and >=~8 grid steps for large tables (v7x two-TC sharding)."""
    bytes_per_row = lanes * 4
    cap = max(8, (((4 << 20) // bytes_per_row) // 8) * 8)
    if n_rows <= 512:
        if n_rows % 8 == 0:
            return min(n_rows, cap)
        return n_rows if n_rows <= cap else cap
    target = _round_up(pl.cdiv(n_rows, 8), 8)   # ~8 grid steps
    return min(cap, max(512, target))


def positional_encoding_forward(x):
    """Equivalent of PositionalEncoding(embedding_dim).forward(x).

    Returns (1, seq_len, embedding_dim) float32.
    """
    seq_len, d = x.shape[1], x.shape[2]
    assert d % 2 == 0, "embedding_dim must be even (as in the PyTorch reference)"

    # ---- host-side precompute (tiny, per-column) ----
    col = jnp.arange(d, dtype=jnp.int32)
    inv_freq = jnp.exp(
        ((col // 2) * 2).astype(jnp.float32) * jnp.float32(-math.log(10000.0) / d)
    )
    phase = (col % 2).astype(jnp.float32) * jnp.float32(math.pi / 2.0)  # cos = sin(x+pi/2)

    pack = (d < 128) and (128 % d == 0)
    if pack:
        # Pack ppr consecutive positions into each lane-dense 128-wide row.
        ppr = 128 // d
        padded_seq = _round_up(seq_len, ppr)
        n_rows, lanes = (padded_seq * d) // 128, 128
        freq_l = jnp.tile(inv_freq, ppr)
        phase_l = jnp.tile(phase, ppr)
        poff = (jnp.arange(128, dtype=jnp.int32) // d).astype(jnp.float32)
        scaled_freq = freq_l * jnp.float32(ppr)
        host_bias = poff * freq_l + phase_l
    else:
        # One position per row; pad the lane dim to a multiple of 128 so stores
        # are unmasked, slice the padding off in the wrapper.
        ppr = 1
        lanes = _round_up(d, 128)
        n_rows = seq_len
        pad = lanes - d
        scaled_freq = jnp.pad(inv_freq, (0, pad)) if pad else inv_freq
        host_bias = jnp.pad(phase, (0, pad)) if pad else phase

    params = jnp.stack([scaled_freq, host_bias], axis=0)   # (2, lanes) f32

    tile_r = _pick_tile_rows(n_rows, lanes)
    grid = (pl.cdiv(n_rows, tile_r),)

    pe = pl.pallas_call(
        _pe_kernel,
        out_shape=jax.ShapeDtypeStruct((n_rows, lanes), jnp.float32),
        grid_spec=pltpu.PrefetchScalarGridSpec(
            num_scalar_prefetch=0,
            grid=grid,
            in_specs=[pl.BlockSpec((2, lanes), lambda i: (0, 0))],   # merged params
            out_specs=pl.BlockSpec((tile_r, lanes), lambda i: (i, 0)),
        ),
        compiler_params=pltpu.CompilerParams(
            dimension_semantics=("parallel",),   # independent row tiles -> both TCs on v7x
        ),
        cost_estimate=pl.CostEstimate(
            flops=3 * n_rows * lanes,
            transcendentals=n_rows * lanes,
            bytes_accessed=n_rows * lanes * 4 + 2 * lanes * 4,
        ),
    )(params)

    if pack:
        pe = pe.reshape(padded_seq, d)[:seq_len]
    elif lanes != d:
        pe = pe[:, :d]
    return pe[None, :, :]
    # TODO(synk): callers should cache the table per (seq_len, d) or fuse x+pe
    # downstream; the table is input-independent.


def _reference(x):
    seq_len, d = x.shape[1], x.shape[2]
    position = jnp.arange(seq_len, dtype=jnp.float32)[:, None]
    div_term = jnp.exp(
        jnp.arange(0, d, 2, dtype=jnp.float32) * (-math.log(10000.0) / d)
    )
    pe = jnp.zeros((seq_len, d), jnp.float32)
    pe = pe.at[:, 0::2].set(jnp.sin(position * div_term))
    pe = pe.at[:, 1::2].set(jnp.cos(position * div_term))
    return pe[None, :, :]


if __name__ == "__main__":
    key = jax.random.PRNGKey(0)

    # x is (batch, seq_len, embedding_dim); only the shape is used.
    batch, seq_len, embedding_dim = 2, 8, 32
    x = jax.random.normal(key, (batch, seq_len, embedding_dim), dtype=jnp.float32)
    out = jax.block_until_ready(positional_encoding_forward(x))
    assert out.shape == (1, seq_len, embedding_dim), out.shape
    assert jnp.allclose(out, _reference(x), atol=1e-5, rtol=1e-5), "mismatch (packed path)"

    # d multiple of 128, ragged seq_len (single full-extent block).
    x2 = jax.random.normal(key, (1, 9, 256), dtype=jnp.float32)
    out2 = jax.block_until_ready(positional_encoding_forward(x2))
    assert out2.shape == (1, 9, 256), out2.shape
    assert jnp.allclose(out2, _reference(x2), atol=1e-5, rtol=1e-5), "mismatch (d%128==0 path)"

    # d not a multiple of 128 -> lane-padded slab sliced in the wrapper.
    x3 = jax.random.normal(key, (1, 13, 96), dtype=jnp.float32)
    out3 = jax.block_until_ready(positional_encoding_forward(x3))
    assert out3.shape == (1, 13, 96), out3.shape
    assert jnp.allclose(out3, _reference(x3), atol=1e-5, rtol=1e-5), "mismatch (padded-lane path)"

    # Multi-block grid with a partial last tile (exercises row0-bias fold).
    x4 = jax.random.normal(key, (1, 1032, 128), dtype=jnp.float32)
    out4 = jax.block_until_ready(positional_encoding_forward(x4))
    assert out4.shape == (1, 1032, 128), out4.shape
    assert jnp.allclose(out4, _reference(x4), atol=5e-4, rtol=1e-5), "mismatch (multi-block path)"

    print("KERNEL_OK")
</pallas_src>

<mosaic_0001>
module attributes {stable_mosaic.version = 11 : i64} {
  func.func @_pe_kernel(%arg0: i32, %arg1: memref<2x128xf32, #tpu.memory_space<vmem>>, %arg2: memref<2x128xf32, #tpu.memory_space<vmem>>) attributes {dimension_semantics = [#tpu.dimension_semantics<parallel>], iteration_bounds = array<i64: 1>, scalar_prefetch = 0 : i64, scratch_operands = 0 : i64, tpu.core_type = #tpu.core_type<tc>, window_params = [{pipeline_mode = #tpu.pipeline_mode<synchronous>, transform_indices = @transform_0, window_bounds = array<i64: 2, 128>}, {transform_indices = @transform_1, window_bounds = array<i64: 2, 128>}]} {
    %c0 = arith.constant 0 : index
    %c0_0 = arith.constant 0 : index
    %0 = vector.load %arg1[%c0, %c0_0] : memref<2x128xf32, #tpu.memory_space<vmem>>, vector<1x128xf32>
    %c2_i32 = arith.constant 2 : i32
    %1 = arith.muli %arg0, %c2_i32 : i32
    %2 = arith.sitofp %1 : i32 to f32
    %3 = vector.broadcast %2 : f32 to vector<1x128xf32>
    %4 = arith.mulf %3, %0 : vector<1x128xf32>
    %c1 = arith.constant 1 : index
    %c0_1 = arith.constant 0 : index
    %5 = vector.load %arg1[%c1, %c0_1] : memref<2x128xf32, #tpu.memory_space<vmem>>, vector<1x128xf32>
    %6 = arith.addf %4, %5 : vector<1x128xf32>
    %7 = tpu.iota {dimensions = array<i32: 0>} : vector<2x128xi32>
    %8 = arith.sitofp %7 : vector<2x128xi32> to vector<2x128xf32>
    %9 = vector.broadcast %0 : vector<1x128xf32> to vector<2x128xf32>
    %10 = arith.mulf %8, %9 : vector<2x128xf32>
    %11 = vector.broadcast %6 : vector<1x128xf32> to vector<2x128xf32>
    %12 = arith.addf %10, %11 : vector<2x128xf32>
    %13 = math.sin %12 : vector<2x128xf32>
    %c0_2 = arith.constant 0 : index
    %c0_3 = arith.constant 0 : index
    %14 = vector.load %arg2[%c0_2, %c0_3] : memref<2x128xf32, #tpu.memory_space<vmem>>, vector<2x128xf32>
    tpu.vector_store %arg2[%c0_2, %c0_3], %13 {strides = array<i32>} : memref<2x128xf32, #tpu.memory_space<vmem>>, vector<2x128xf32>,
    return
  }
  func.func @transform_0(%arg0: i32) -> (i32, i32) {
    %c0_i32 = arith.constant 0 : i32
    %c0_i32_0 = arith.constant 0 : i32
    %c0_i32_1 = arith.constant 0 : i32
    return %c0_i32, %c0_i32_0 : i32, i32
  }
  func.func @transform_1(%arg0: i32) -> (i32, i32) {
    %c0_i32 = arith.constant 0 : i32
    %c0_i32_0 = arith.constant 0 : i32
    return %arg0, %c0_i32 : i32, i32
  }
}

</mosaic_0001>

<llo_original>
// kernel: tpu_custom_call.1
$region0: #{tpu_custom_call.1}
  #allocation0 [shape = 'u32[]', space=smem, size = 0x4, offset = 0x4, fixed_abs, tag = 'smem constant byte address 0x4 - core index']
  #allocation1 [shape = 'u32[72,128]{1,0:T(1,128)}', space=vmem, size = 0x9000, scoped, tag = 'internal scratch']
  %s0 = inlined_call_operand.hbm [shape: f32[2,128], index: 0, kind: input, shape index: {}]
  %s1 = inlined_call_operand.hbm [shape: f32[2,128], index: 1, kind: output, shape index: {}]
  %s2 = sld [smem:[#allocation0]]
  $region18: #{tpu_custom_call.1} parent=0
    _
  %s4 = ssub.s32 1, %s2
  %s5 = scalar_select 0, %s4, %s2
  $region1: #{tpu_custom_call.1} parent=0
    #allocation2 [shape = 'u8[1024]{0}', space=vmem, size = 0x400, scoped, tag = 'input window, operand 0, single buffered']
    #allocation3 [shape = 's32[1]{0}', space=sflag, size = 0x4, scoped, tag = 'scoped memory for tpu_custom_call.1']
    #allocation4 [shape = 's32[1]{0}', space=sflag, size = 0x4, scoped, tag = 'scoped memory for tpu_custom_call.1']
    #allocation5 [shape = 'u8[1024]{0}', space=vmem, size = 0x400, scoped, tag = 'output window, operand 0, single buffered']
    %6 = vsyncpa [#allocation3], 0
    %7 = vsyncpa [#allocation4], 0
    // Predicated region
    $region2: #{tpu_custom_call.1} parent=1 // pred_check
      _
    $region3: #{tpu_custom_call.1} parent=1 // pred_check_branch
      %9 = sbr.rel (0) target = $region5
    $region4: #{tpu_custom_call.1} parent=1 // pred_region
      %11 = vsyncadd [#allocation3], 0
      %s13 = sshll.u32 %s0, 4
      %s14 = int_to_ptr.hbm [resolvable:$true] %s13
      %s15 = sshll.u32 [#allocation2], 4
      %s16 = int_to_ptr.vmem [resolvable:$true] %s15
      %18 = dma.hbm_to_vmem [thread:$0]  %s14, 32, %s16, [#allocation3]
    $region5: #{tpu_custom_call.1} parent=1 // pred_fallthru
      _
    // Predicated region
    $region6: #{tpu_custom_call.1} parent=1 // pred_check
      _
    $region7: #{tpu_custom_call.1} parent=1 // pred_check_branch
      %20 = sbr.rel (0) target = $region9
    $region8: #{tpu_custom_call.1} parent=1 // pred_region
      %22 = dma.done [#allocation3], 32
    $region9: #{tpu_custom_call.1} parent=1 // pred_fallthru
      _
    %v23 = vld [vmem:[#allocation2] sm:$0x1]
    %s24 = smul.u32 0, 2
    %s25 = scvt.s32.f32 %s24
    %v26 = vstv %s25
    %v27 = vmul.f32 %v26, %v23
    %v28 = vld [vmem:[#allocation2 + $0x1] sm:$0x1]
    %v29 = vadd.f32 %v27, %v28
    %v30 = vlaneseq
    %v31 = vshrl.u32 %v30, 7
    %v32 = vcvt.s32.f32 %v31
    %v33 = vperm.slane %v23, 0
    %v34 = vmul.f32 %v32, %v33
    %v35 = vperm.slane %v29, 0
    %v36 = vadd.f32 %v34, %v35
    %v37 = vand.u32 2147483647, %v36
    %vm38 = vcmp.le.f32.partialorder %v37, 0.7853982
    %vm39 = vcmp.lt.s32.totalorder %v36, 0
    %v40 = vand.u32 %v36, 2139095040
    %v41 = vshrl.u32 %v40, 23
    %v42 = vsub.s32 %v41, 127
    %v43 = vand.u32 2147483647, %v36
    %v44 = vand.u32 %v43, 8388607
    %v45 = vor.u32 %v44, 8388608
    %v46 = vsub.s32 0, %v45
    %v47 = vadd.s32 %v42, 1
    %vm48 = vcmp.gt.s32.totalorder %v47, 0
    %v49 = vsel %vm48, %v47, 0
    %v50 = vshrl.u32 %v49, 5
    %v51 = vand.u32 %v49, 31
    %v52 = vsub.s32 32, %v51
    %v53 = vshrl.u32 683565275, %v52
    %v54 = vshll.u32 683565275, %v51
    %v55 = vshrl.u32 2475754826, %v52
    %v56 = vor.u32 %v54, %v55
    %v57 = vshll.u32 2475754826, %v51
    %v58 = vshrl.u32 2131351028, %v52
    %v59 = vor.u32 %v57, %v58
    %v60 = vshll.u32 2131351028, %v51
    %v61 = vshrl.u32 2102212464, %v52
    %v62 = vor.u32 %v60, %v61
    %v63 = vshll.u32 2102212464, %v51
    %v64 = vshrl.u32 920167782, %v52
    %v65 = vor.u32 %v63, %v64
    %v66 = vshll.u32 920167782, %v51
    %v67 = vshrl.u32 1326507024, %v52
    %v68 = vor.u32 %v66, %v67
    %vm69 = vcmp.lt.s32.totalorder %v50, 1
    %vm70 = vcmp.lt.s32.totalorder %v50, 2
    %vm71 = vcmp.lt.s32.totalorder %v50, 3
    %vm72 = vcmp.lt.s32.totalorder %v50, 4
    %v73 = vsel %vm69, %v53, %v56
    %v74 = vsel %vm72, %v62, 2102212464
    %v75 = vsel %vm71, %v59, %v74
    %v76 = vsel %vm70, %v73, %v75
    %v77 = vsel %vm69, %v56, %v59
    %v78 = vsel %vm72, %v65, 920167782
    %v79 = vsel %vm71, %v62, %v78
    %v80 = vsel %vm70, %v77, %v79
    %v81 = vsel %vm69, %v59, %v62
    %v82 = vsel %vm72, %v68, 1326507024
    %v83 = vsel %vm71, %v65, %v82
    %v84 = vsel %vm70, %v81, %v83
    %v85 = vshll.u32 %v45, 8
    %v86 = vand.u32 %v85, 65535
    %v87 = vshrl.u32 %v85, 16
    %v88 = vand.u32 %v84, 65535
    %v89 = vshrl.u32 %v84, 16
    %v90 = vmul.u32 %v86, %v88
    %v91 = vmul.u32 %v86, %v89
    %v92 = vmul.u32 %v87, %v88
    %v93 = vmul.u32 %v87, %v89
    %v94 = vshll.u32 %v91, 16
    %v95 = vshrl.u32 %v91, 16
    %v96 = vshll.u32 %v92, 16
    %v97 = vshrl.u32 %v92, 16
    %vm98 = vc.u32 %v90, %v94
    %v99 = vsel %vm98, 1, 0
    %v100 = vadd.s32 %v90, %v94
    %v101 = vadd.s32 %v93, %v99
    %vm102 = vc.u32 %v100, %v96
    %v103 = vsel %vm102, 1, 0
    %v104 = vadd.s32 %v100, %v96
    %v105 = vadd.s32 %v101, %v103
    %v106 = vadd.s32 %v105, %v95
    %v107 = vadd.s32 %v106, %v97
    %v108 = vand.u32 %v85, 65535
    %v109 = vshrl.u32 %v85, 16
    %v110 = vand.u32 %v80, 65535
    %v111 = vshrl.u32 %v80, 16
    %v112 = vmul.u32 %v108, %v110
    %v113 = vmul.u32 %v108, %v111
    %v114 = vmul.u32 %v109, %v110
    %v115 = vmul.u32 %v109, %v111
    %v116 = vshll.u32 %v113, 16
    %v117 = vshrl.u32 %v113, 16
    %v118 = vshll.u32 %v114, 16
    %v119 = vshrl.u32 %v114, 16
    %vm120 = vc.u32 %v112, %v116
    %v121 = vsel %vm120, 1, 0
    %v122 = vadd.s32 %v112, %v116
    %v123 = vadd.s32 %v115, %v121
    %vm124 = vc.u32 %v122, %v118
    %v125 = vsel %vm124, 1, 0
    %v126 = vadd.s32 %v122, %v118
    %v127 = vadd.s32 %v123, %v125
    %v128 = vadd.s32 %v127, %v117
    %v129 = vadd.s32 %v128, %v119
    %v130 = vmul.u32 %v85, %v76
    %v131 = vadd.s32 %v107, %v126
    %vm132 = vc.u32 %v107, %v126
    %v133 = vadd.s32 %v129, 1
    %v134 = vsel %vm132, %v133, %v129
    %v135 = vadd.s32 %v130, %v134
    %v136 = vadd.s32 %v135, 536870912
    %v137 = vshrl.u32 %v136, 30
    %v138 = vshll.u32 %v137, 30
    %v139 = vsub.s32 %v135, %v138
    %vm140 = vcmp.lt.s32.totalorder %v139, 0
    %v141 = vsub.s32 0, %v139
    %v142 = vsel %vm140, %v141, %v139
    %v143 = vclz %v142
    %v144 = vsub.s32 %v143, 2
    %vm145 = vcmp.gt.s32.totalorder 0, %v144
    %v146 = vsel %vm145, 0, %v144
    %v147 = vsub.s32 32, %v146
    %v148 = vshll.u32 %v139, %v146
    %v149 = vshrl.u32 %v131, %v147
    %v150 = vor.u32 %v148, %v149
    %v151 = vsub.s32 4294967266, %v146
    %v152 = vadd.s32 %v151, 127
    %v153 = vshll.u32 %v152, 23
    %v154 = vor.u32 4788187, %v153
    %v155 = vand.u32 2147483647, %v154
    %v157 = vcvt.s32.f32 %v150
    %v158 = vmul.f32 %v157, %v155
    %v159 = vxor.u32 %v158, 2147483648
    %v160 = vsel %vm39, %v159, %v158
    %v161 = vsub.s32 4, %v137
    %v162 = vsel %vm39, %v161, %v137
    %v163 = vsel %vm38, %v36, %v160
    %v164 = vsel %vm38, 0, %v162
    %v165 = vmul.f32 %v163, %v163
    %v166 = vmul.f32 %v165, -0.001358992
    %v167 = vadd.f32 %v166, 0.041655596
    %v168 = vmul.f32 %v165, %v167
    %v169 = vadd.f32 %v168, -0.4999988
    %v170 = vmul.f32 %v165, %v169
    %v171 = vadd.f32 1.0, %v170
    %v172 = vmul.f32 %v163, %v163
    %v173 = vmul.f32 %v172, -0.00019511016
    %v174 = vadd.f32 %v173, 0.008332121
    %v175 = vmul.f32 %v172, %v174
    %v176 = vadd.f32 %v175, -0.16666654
    %v177 = vmul.f32 %v172, %v176
    %v178 = vadd.f32 %v177, 1.0
    %v179 = vmul.f32 %v178, %v163
    %vm180 = vweird.f32 %v36
    %v181 = vadd.s32 %v164, 3
    %v182 = vand.u32 %v181, 3
    %vm183 = vcmp.lt.s32.totalorder %v182, 2
    %vm184 = vcmp.eq.s32.totalorder %v182, 0
    %v185 = vxor.u32 %v179, 2147483648
    %v186 = vsel %vm184, %v171, %v185
    %vm187 = vcmp.eq.s32.totalorder %v182, 2
    %v188 = vxor.u32 %v171, 2147483648
    %v189 = vsel %vm187, %v188, %v179
    %v190 = vsel %vm183, %v186, %v189
    %v191 = vsel %vm180, nan, %v190
    %192 = vst [vmem:[#allocation5] sm:$0x3] %v191
    // Predicated region
    $region10: #{tpu_custom_call.1} parent=1 // pred_check
      _
    $region11: #{tpu_custom_call.1} parent=1 // pred_check_branch
      %194 = sbr.rel (0) target = $region13
    $region12: #{tpu_custom_call.1} parent=1 // pred_region
      %196 = vsyncadd [#allocation4], 0
      %s198 = sshll.u32 [#allocation5], 4
      %s199 = int_to_ptr.vmem [resolvable:$true] %s198
      %s200 = sshll.u32 %s1, 4
      %s201 = int_to_ptr.hbm [resolvable:$true] %s200
      %203 = dma.vmem_to_hbm [thread:$0]  %s199, 32, %s201, [#allocation4]
    $region13: #{tpu_custom_call.1} parent=1 // pred_fallthru
      _
    // Predicated region
    $region14: #{tpu_custom_call.1} parent=1 // pred_check
      _
    $region15: #{tpu_custom_call.1} parent=1 // pred_check_branch
      %205 = sbr.rel (0) target = $region17
    $region16: #{tpu_custom_call.1} parent=1 // pred_region
      %207 = dma.done [#allocation4], 32
    $region17: #{tpu_custom_call.1} parent=1 // pred_fallthru
      _
    %208 = vsyncpa [#allocation3], 1
    %209 = vsyncpa [#allocation4], 1

</llo_original>
